<compile_context>
chip_gen: v7x
topology: tpu7x:2x2x1
jax: 0.10.0
libtpu: 0.0.40
codegen_flags: <defaults>
</compile_context>

<pallas_src>
import jax
import jax.numpy as jnp
from jax.experimental import pallas as pl
from jax.experimental.pallas import tpu as pltpu

LANE = 128      # TPU lane width (last-dim granularity)
SUBLANE = 8     # sublane granularity (second-to-last dim)
ROW_TILE = 512  # mem-bound sweet spot (~85% of HBM roofline on v6e)


def _round_up(a: int, b: int) -> int:
    return ((a + b - 1) // b) * b


def linear_kernel(x_ref, wt_ref, b_ref, o_ref):
    # x_ref:  (tile_n, F)       activation tile
    # wt_ref: (F, O_pad)        pre-transposed, lane-padded weight (resident)
    # b_ref:  (1, O_pad)        lane-padded bias (resident)
    # o_ref:  (tile_n, O_pad)   lane-dense output tile
    y = jnp.dot(x_ref[...], wt_ref[...], preferred_element_type=jnp.float32)
    o_ref[...] = (y + b_ref[...]).astype(o_ref.dtype)


def simple_nn_forward(x, weight, bias):
    """y = x @ weight.T + bias  (same semantics as nn.Linear(input_dim, output_dim))."""
    n, f = x.shape
    o, f2 = weight.shape
    assert f == f2 and bias.shape == (o,)

    # --- wrapper-side layout plumbing (one-time, plain XLA) -----------------
    # Pre-transpose weight to (F, O) and pad the output dim up to a full
    # 128-lane register so every in-kernel store is unmasked / lane-dense.
    o_pad = _round_up(max(o, LANE), LANE)
    wt = jnp.zeros((f, o_pad), dtype=weight.dtype).at[:, :o].set(weight.T)
    b2d = jnp.zeros((1, o_pad), dtype=bias.dtype).at[:, :o].set(bias)

    # Tile N: big inputs get 512-row tiles (pipelined, parallel across TCs);
    # tiny inputs get a single sublane-aligned block.
    tile_n = ROW_TILE if n >= ROW_TILE else _round_up(max(n, SUBLANE), SUBLANE)
    n_pad = _round_up(n, tile_n)
    if n_pad != n:
        x = jnp.pad(x, ((0, n_pad - n), (0, 0)))

    grid = (n_pad // tile_n,)

    out_padded = pl.pallas_call(
        linear_kernel,
        out_shape=jax.ShapeDtypeStruct((n_pad, o_pad), x.dtype),
        grid_spec=pl.GridSpec(
            grid=grid,
            in_specs=[
                pl.BlockSpec((tile_n, f), lambda i: (i, 0)),   # x tile marches over N
                pl.BlockSpec((f, o_pad), lambda i: (0, 0)),    # weight resident
                pl.BlockSpec((1, o_pad), lambda i: (0, 0)),    # bias resident
            ],
            out_specs=pl.BlockSpec((tile_n, o_pad), lambda i: (i, 0)),
        ),
        compiler_params=pltpu.CompilerParams(
            # Megacore sharding on v7x; harmless no-op on single-TC v5e/v6e.
            dimension_semantics=("parallel",),
        ),
    )(x, wt, b2d)

    # Slice away the row/lane padding (padded lanes are exactly zero).
    return out_padded[:n, :o]


if __name__ == "__main__":
    # Shapes consistent with the module: minesweeper has 7 features, 2 classes.
    N, INPUT_DIM, OUTPUT_DIM = 16, 7, 2

    key = jax.random.PRNGKey(0)
    kx, kw, kb = jax.random.split(key, 3)

    x = jax.random.normal(kx, (N, INPUT_DIM), dtype=jnp.float32)
    # Deterministic parameter init (uniform, like torch Linear's default range).
    bound = 1.0 / (INPUT_DIM ** 0.5)
    weight = jax.random.uniform(
        kw, (OUTPUT_DIM, INPUT_DIM), dtype=jnp.float32, minval=-bound, maxval=bound
    )
    bias = jax.random.uniform(
        kb, (OUTPUT_DIM,), dtype=jnp.float32, minval=-bound, maxval=bound
    )

    out = simple_nn_forward(x, weight, bias)
    out = jax.block_until_ready(out)

    # Sanity check against plain JAX reference.
    ref = x @ weight.T + bias
    assert out.shape == (N, OUTPUT_DIM)
    assert jnp.allclose(out, ref, atol=1e-5, rtol=1e-5)

    print("KERNEL_OK")
</pallas_src>

<mosaic_0001>
module attributes {stable_mosaic.version = 11 : i64} {
  func.func @linear_kernel(%arg0: i32, %arg1: memref<16x7xf32, #tpu.memory_space<vmem>>, %arg2: memref<7x128xf32, #tpu.memory_space<vmem>>, %arg3: memref<1x128xf32, #tpu.memory_space<vmem>>, %arg4: memref<16x128xf32, #tpu.memory_space<vmem>>) attributes {dimension_semantics = [#tpu.dimension_semantics<parallel>], iteration_bounds = array<i64: 1>, scalar_prefetch = 0 : i64, scratch_operands = 0 : i64, tpu.core_type = #tpu.core_type<tc>, window_params = [{transform_indices = @transform_0, window_bounds = array<i64: 16, 7>}, {pipeline_mode = #tpu.pipeline_mode<synchronous>, transform_indices = @transform_1, window_bounds = array<i64: 7, 128>}, {pipeline_mode = #tpu.pipeline_mode<synchronous>, transform_indices = @transform_2, window_bounds = array<i64: 1, 128>}, {transform_indices = @transform_3, window_bounds = array<i64: 16, 128>}]} {
    %c0 = arith.constant 0 : index
    %c0_0 = arith.constant 0 : index
    %0 = vector.load %arg1[%c0, %c0_0] : memref<16x7xf32, #tpu.memory_space<vmem>>, vector<16x7xf32>
    %c0_1 = arith.constant 0 : index
    %c0_2 = arith.constant 0 : index
    %1 = vector.load %arg2[%c0_1, %c0_2] : memref<7x128xf32, #tpu.memory_space<vmem>>, vector<7x128xf32>
    %cst = arith.constant dense<0.000000e+00> : vector<16x128xf32>
    %2 = tpu.matmul %0, %1, %cst {dimension_numbers = #tpu.dot_dimension_numbers<[1], [0], [0], [1], [0, 0, 1, 1], [], []>} : vector<16x7xf32>, vector<7x128xf32>, vector<16x128xf32> -> vector<16x128xf32>
    %c0_3 = arith.constant 0 : index
    %c0_4 = arith.constant 0 : index
    %3 = vector.load %arg3[%c0_3, %c0_4] : memref<1x128xf32, #tpu.memory_space<vmem>>, vector<1x128xf32>
    %4 = vector.broadcast %3 : vector<1x128xf32> to vector<16x128xf32>
    %5 = arith.addf %2, %4 : vector<16x128xf32>
    %c0_5 = arith.constant 0 : index
    %c0_6 = arith.constant 0 : index
    %6 = vector.load %arg4[%c0_5, %c0_6] : memref<16x128xf32, #tpu.memory_space<vmem>>, vector<16x128xf32>
    tpu.vector_store %arg4[%c0_5, %c0_6], %5 {strides = array<i32>} : memref<16x128xf32, #tpu.memory_space<vmem>>, vector<16x128xf32>,
    return
  }
  func.func @transform_0(%arg0: i32) -> (i32, i32) {
    %c0_i32 = arith.constant 0 : i32
    %c0_i32_0 = arith.constant 0 : i32
    return %arg0, %c0_i32 : i32, i32
  }
  func.func @transform_1(%arg0: i32) -> (i32, i32) {
    %c0_i32 = arith.constant 0 : i32
    %c0_i32_0 = arith.constant 0 : i32
    %c0_i32_1 = arith.constant 0 : i32
    return %c0_i32, %c0_i32_0 : i32, i32
  }
  func.func @transform_2(%arg0: i32) -> (i32, i32) {
    %c0_i32 = arith.constant 0 : i32
    %c0_i32_0 = arith.constant 0 : i32
    %c0_i32_1 = arith.constant 0 : i32
    return %c0_i32, %c0_i32_0 : i32, i32
  }
  func.func @transform_3(%arg0: i32) -> (i32, i32) {
    %c0_i32 = arith.constant 0 : i32
    %c0_i32_0 = arith.constant 0 : i32
    return %arg0, %c0_i32 : i32, i32
  }
}

</mosaic_0001>

<llo_original>
// kernel: tpu_custom_call.1
$region0: #{tpu_custom_call.1}
  #allocation0 [shape = 'u32[]', space=smem, size = 0x4, offset = 0x4, fixed_abs, tag = 'smem constant byte address 0x4 - core index']
  #allocation1 [shape = 'u32[144,128]{1,0:T(1,128)}', space=vmem, size = 0x12000, scoped, tag = 'internal scratch']
  %s0 = inlined_call_operand.vmem [shape: f32[16,7], index: 0, kind: input, shape index: {}]
  %s1 = inlined_call_operand.vmem [shape: f32[7,128], index: 1, kind: input, shape index: {}]
  %s2 = inlined_call_operand.vmem [shape: f32[1,128], index: 2, kind: input, shape index: {}]
  %s3 = inlined_call_operand.hbm [shape: f32[16,128], index: 3, kind: output, shape index: {}]
  %s4 = sld [smem:[#allocation0]]
  $region22: #{tpu_custom_call.1} parent=0
    _
  %s6 = ssub.s32 1, %s4
  %s7 = scalar_select 0, %s6, %s4
  $region1: #{tpu_custom_call.1} parent=0
    #allocation2 [shape = 'u8[8192]{0}', space=vmem, size = 0x2000, scoped, tag = 'output window, operand 0, single buffered']
    #allocation3 [shape = 's32[1]{0}', space=sflag, size = 0x4, scoped, tag = 'scoped memory for tpu_custom_call.1']
    %8 = vsyncpa [#allocation3], 0
    // Predicated region
    $region2: #{tpu_custom_call.1} parent=1 // pred_check
      _
    $region3: #{tpu_custom_call.1} parent=1 // pred_check_branch
      %10 = sbr.rel (0) target = $region5
    $region4: #{tpu_custom_call.1} parent=1 // pred_region
      _
    $region5: #{tpu_custom_call.1} parent=1 // pred_fallthru
      _
    // Predicated region
    $region6: #{tpu_custom_call.1} parent=1 // pred_check
      _
    $region7: #{tpu_custom_call.1} parent=1 // pred_check_branch
      %12 = sbr.rel (0) target = $region9
    $region8: #{tpu_custom_call.1} parent=1 // pred_region
      _
    $region9: #{tpu_custom_call.1} parent=1 // pred_fallthru
      _
    // Predicated region
    $region10: #{tpu_custom_call.1} parent=1 // pred_check
      _
    $region11: #{tpu_custom_call.1} parent=1 // pred_check_branch
      %14 = sbr.rel (0) target = $region13
    $region12: #{tpu_custom_call.1} parent=1 // pred_region
      _
    $region13: #{tpu_custom_call.1} parent=1 // pred_fallthru
      _
    %v15 = vld [vmem:[%s0] sm:$0xff]
    %v16 = vld [vmem:[%s0 + $0x8] sm:$0xff]
    %v17 = vld [vmem:[%s1] sm:$0x7f]
    %v18 = vld [vmem:[%s2] sm:$0x1]
    %v20 = vlaneseq
    %v21 = vshrl.u32 %v20, 7
    %v22 = vsub.s32 0, %v21
    %v23 = vrot.slane %v18, %v22
    %vm25 = vcmask 56320
    %v27 = vsel %vm25, %v15, 0
    %v30 = vsel %vm25, %v16, 0
    %vm32 = vcmask 1046528
    %v34 = vsel %vm32, %v17, 0
    %36 = vmatprep.subr.mxu0 0.0
    %37 = vmatpush1.msra.mxu0 %v34
    %38 = vmatprep.subr.mxu0 0.0
    %39 = vmatpush1.msra.mxu0 0.0
    %40 = vmatprep.subr.mxu0 0.0
    %41 = vmatpush1.msra.mxu0 0.0
    %42 = vmatprep.subr.mxu0 0.0
    %43 = vmatpush1.msra.mxu0 0.0
    %44 = vmatprep.subr.mxu0 0.0
    %45 = vmatpush1.msra.mxu0 0.0
    %46 = vmatprep.subr.mxu0 0.0
    %47 = vmatpush1.msra.mxu0 0.0
    %48 = vmatprep.subr.mxu0 0.0
    %49 = vmatpush1.msra.mxu0 0.0
    %50 = vmatprep.subr.mxu0 0.0
    %51 = vmatpush1.msra.mxu0 0.0
    %52 = vmatprep.subr.mxu0 0.0
    %53 = vmatpush1.msra.mxu0 0.0
    %54 = vmatprep.subr.mxu0 0.0
    %55 = vmatpush1.msra.mxu0 0.0
    %56 = vmatprep.subr.mxu0 0.0
    %57 = vmatpush1.msra.mxu0 0.0
    %58 = vmatprep.subr.mxu0 0.0
    %59 = vmatpush1.msra.mxu0 0.0
    %60 = vmatprep.subr.mxu0 0.0
    %61 = vmatpush1.msra.mxu0 0.0
    %62 = vmatprep.subr.mxu0 0.0
    %63 = vmatpush1.msra.mxu0 0.0
    %64 = vmatprep.subr.mxu0 0.0
    %65 = vmatpush1.msra.mxu0 0.0
    %66 = vmatprep.subr.mxu0 0.0
    %67 = vmatpush1.msra.mxu0 0.0
    %68 = vmatprep.subr.mxu0 0.0
    %69 = vmatpush1.msra.mxu0 0.0
    %70 = vmatprep.subr.mxu0 0.0
    %71 = vmatpush1.msra.mxu0 0.0
    %72 = vmatprep.subr.mxu0 0.0
    %73 = vmatpush1.msra.mxu0 0.0
    %74 = vmatprep.subr.mxu0 0.0
    %75 = vmatpush1.msra.mxu0 0.0
    %76 = vmatprep.subr.mxu0 0.0
    %77 = vmatpush1.msra.mxu0 0.0
    %78 = vmatprep.subr.mxu0 0.0
    %79 = vmatpush1.msra.mxu0 0.0
    %80 = vmatprep.subr.mxu0 0.0
    %81 = vmatpush1.msra.mxu0 0.0
    %82 = vmatprep.subr.mxu0 0.0
    %83 = vmatpush1.msra.mxu0 0.0
    %84 = vmatprep.subr.mxu0 0.0
    %85 = vmatpush1.msra.mxu0 0.0
    %86 = vmatprep.subr.mxu0 0.0
    %87 = vmatpush1.msra.mxu0 0.0
    %88 = vmatprep.subr.mxu0 0.0
    %89 = vmatpush1.msra.mxu0 0.0
    %90 = vmatprep.subr.mxu0 0.0
    %91 = vmatpush1.msra.mxu0 0.0
    %92 = vmatprep.subr.mxu0 0.0
    %93 = vmatpush1.msra.mxu0 0.0
    %94 = vmatprep.subr.mxu0 0.0
    %95 = vmatpush1.msra.mxu0 0.0
    %96 = vmatprep.subr.mxu0 0.0
    %97 = vmatpush1.msra.mxu0 0.0
    %98 = vmatprep.subr.mxu0 0.0
    %99 = vmatpush1.msra.mxu0 0.0
    %100 = vmatprep.mubr.f32.mxu0 0.0
    %101 = vmatmul.mubr.f32.gmra.mrb[0].mxu0 %v27
    %v102 = vpop.f32.mrb[0].mxu0
    %v103 = vadd.f32 %v23, %v102
    %v104 = vpop.f32.mrb[0].mxu0
    %105 = vmatprep.mubr.f32.mxu0 0.0
    %106 = vmatmul.mubr.f32.gmra.mrb[0].mxu0 %v30
    %v107 = vpop.f32.mrb[0].mxu0
    %v108 = vadd.f32 %v23, %v107
    %v109 = vpop.f32.mrb[0].mxu0
    %110 = vdwg.mxu0
    %111 = vst [vmem:[#allocation2] sm:$0xff] %v103
    %112 = vst [vmem:[#allocation2 + $0x8] sm:$0xff] %v108
    // Predicated region
    $region14: #{tpu_custom_call.1} parent=1 // pred_check
      _
    $region15: #{tpu_custom_call.1} parent=1 // pred_check_branch
      %114 = sbr.rel (0) target = $region17
    $region16: #{tpu_custom_call.1} parent=1 // pred_region
      %s116 = ssub.s32 256, 256
      %117 = vsyncadd [#allocation3], %s116
      %s118 = sshll.u32 [#allocation2], 4
      %s119 = int_to_ptr.vmem [resolvable:$true] %s118
      %124 = dma.vmem_to_hbm [thread:$0]  %s119, 256, %s3, [#allocation3], 128, 128, 8
    $region17: #{tpu_custom_call.1} parent=1 // pred_fallthru
      _
    // Predicated region
    $region18: #{tpu_custom_call.1} parent=1 // pred_check
      _
    $region19: #{tpu_custom_call.1} parent=1 // pred_check_branch
      %126 = sbr.rel (0) target = $region21
    $region20: #{tpu_custom_call.1} parent=1 // pred_region
      %127 = dma.done [#allocation3], 256
    $region21: #{tpu_custom_call.1} parent=1 // pred_fallthru
      _
    %128 = vsyncpa [#allocation3], 1

</llo_original>
